<compile_context>
chip_gen: v7x
topology: tpu7x:2x2x1
jax: 0.10.0
libtpu: 0.0.40
codegen_flags: <defaults>
</compile_context>

<pallas_src>
import functools

import jax
import jax.numpy as jnp
from jax.experimental import pallas as pl
from jax.experimental.pallas import tpu as pltpu


@functools.cache
def _roll_is_available():
    """pltpu.roll always lowers on Mosaic/TPU; probe once in case the current
    execution mode (e.g. an interpret harness) lacks an implementation."""
    def _probe(x_ref, o_ref):
        r = pltpu.roll(x_ref[...], shift=1, axis=1)   # lane shift
        o_ref[...] = pltpu.roll(r, shift=1, axis=0)   # sublane shift

    try:
        x = jnp.zeros((8, 128), jnp.float32)
        out = pl.pallas_call(
            _probe, out_shape=jax.ShapeDtypeStruct((8, 128), jnp.float32))(x)
        jax.block_until_ready(out)
        return True
    except Exception:  # any failure -> use the portable concat path
        return False


def _grad_loss_kernel(x_ref, y_ref, out_ref, acc_ref, cx_ref, cy_ref, *,
                      eps, height, ragged, use_roll):
    t = pl.program_id(1)                 # H-tile index within the plane
    n_t = pl.num_programs(1)
    th, w = acc_ref.shape                # static tile shape

    @pl.when(t == 0)
    def _init():
        acc_ref[...] = jnp.zeros_like(acc_ref)

    x = x_ref[...].astype(jnp.float32)
    y = y_ref[...].astype(jnp.float32)

    # At the plane's first tile, the up-neighbour of global row 0 is the
    # reflection row (row 1).  Seed the halo carry with it so grad_map never
    # needs a "first tile?" select.
    @pl.when(t == 0)
    def _seed_halo():
        cx_ref[...] = x[1:2, :]
        cy_ref[...] = y[1:2, :]

    if use_roll:
        # Tiny boundary masks: lane / sublane vectors, not full (th, w) tiles.
        col0 = jax.lax.broadcasted_iota(jnp.int32, (1, w), 1) == 0
        row0 = jax.lax.broadcasted_iota(jnp.int32, (th, 1), 0) == 0

        def grad_map(v, top_row):
            left = pltpu.roll(v, shift=1, axis=1)      # lane shift (XLU)
            left = jnp.where(col0, v[:, 1:2], left)    # col 0: reflection
            up = pltpu.roll(v, shift=1, axis=0)        # sublane shift (XLU)
            up = jnp.where(row0, top_row, up)          # row 0: halo / reflection
            gx = v - left
            gy = v - up
            return jnp.sqrt(gx * gx + gy * gy + eps)
    else:
        def grad_map(v, top_row):
            left = jnp.concatenate([v[:, 1:2], v[:, : w - 1]], axis=1)
            up = jnp.concatenate([top_row, v[: th - 1, :]], axis=0)
            gx = v - left
            gy = v - up
            return jnp.sqrt(gx * gx + gy * gy + eps)

    g_in = grad_map(x, cx_ref[...])
    g_tg = grad_map(y, cy_ref[...])
    diff = jnp.abs(g_in - g_tg)

    # Hot loop: elementwise accumulate only (VPU); one reduce per plane below.
    if ragged:
        # Only the plane's last H-tile has rows past `height`; mask only there.
        @pl.when(t != n_t - 1)
        def _acc_full():
            acc_ref[...] += diff

        @pl.when(t == n_t - 1)
        def _acc_masked():
            row = jax.lax.broadcasted_iota(jnp.int32, (th, 1), 0)
            valid = (t * th + row) < height
            acc_ref[...] += jnp.where(valid, diff, 0.0)
    else:
        acc_ref[...] += diff

    # Carry this tile's last row as the next tile's top halo (unused -- and
    # harmless -- when this is the plane's last tile).
    cx_ref[...] = x[th - 1:th, :]
    cy_ref[...] = y[th - 1:th, :]

    @pl.when(t == n_t - 1)
    def _finalize():
        out_ref[...] = jnp.sum(acc_ref[...]).reshape(1, 1)


def _choose_tile_h(h, w, in_itemsize, budget_bytes=12 * 1024 * 1024):
    """Pick the H tile height.

    Per-row bytes cover: 2 inputs x 2 pipeline buffers (native dtype), the
    f32 accumulator, and ~6 full-tile f32 temporaries live in the kernel body
    (x/y upcasts, shifted neighbours, g_in/g_tg/diff).  A 12 MiB budget keeps
    the kernel inside v5e's 16 MiB default scoped VMEM and well under v7x's
    64 MiB physical VMEM.  Prefer tile heights that divide h so the ragged
    mask disappears from the hot loop entirely.
    """
    row_align = {1: 32, 2: 16}.get(in_itemsize, 8)   # bf16 packs 2 rows/sublane
    per_row = w * (4 * in_itemsize + 4 + 6 * 4)
    th_max = max(row_align, (budget_bytes // per_row) // row_align * row_align)
    if th_max >= h:
        return h
    for th in range(th_max, row_align - 1, -row_align):
        if h % th == 0:
            return th
    return th_max        # no divisor found: keep budget tile, mask last tile


def gradient_loss_2(inp, tgt, eps=1e-6, tile_h=None):
    """Pallas implementation of GradientLoss_2.forward (l1 loss on gradient maps)."""
    assert inp.shape == tgt.shape, (inp.shape, tgt.shape)
    n, c, h, w = inp.shape
    assert h >= 2 and w >= 2, "reflection pad of 1 needs spatial dims >= 2"
    nc = n * c

    # Keep native dtype in HBM (bf16 stays bf16); cast to f32 inside the kernel.
    x = inp.reshape(nc, h, w)
    y = tgt.reshape(nc, h, w)

    th = tile_h if tile_h is not None else _choose_tile_h(h, w, x.dtype.itemsize)
    n_ht = pl.cdiv(h, th)
    ragged = (h % th) != 0

    kernel = functools.partial(
        _grad_loss_kernel, eps=float(eps), height=h, ragged=ragged,
        use_roll=_roll_is_available())

    plane_sums = pl.pallas_call(
        kernel,
        out_shape=jax.ShapeDtypeStruct((nc, 1, 1), jnp.float32),
        grid_spec=pltpu.PrefetchScalarGridSpec(
            num_scalar_prefetch=0,
            grid=(nc, n_ht),
            in_specs=[
                pl.BlockSpec((None, th, w), lambda i, t: (i, t, 0)),
                pl.BlockSpec((None, th, w), lambda i, t: (i, t, 0)),
            ],
            out_specs=pl.BlockSpec((None, 1, 1), lambda i, t: (i, 0, 0)),
            scratch_shapes=[
                pltpu.VMEM((th, w), jnp.float32),   # |grad diff| accumulator
                pltpu.VMEM((1, w), jnp.float32),    # top-halo carry (input)
                pltpu.VMEM((1, w), jnp.float32),    # top-halo carry (target)
            ],
        ),
        compiler_params=pltpu.CompilerParams(
            dimension_semantics=("parallel", "arbitrary"),
            vmem_limit_bytes=32 * 1024 * 1024,
        ),
    )(x, y)

    total_count = n * c * h * w
    return jnp.sum(plane_sums) / jnp.float32(total_count)


def _reference(inp, tgt, eps=1e-6):
    """Plain-JAX reference mirroring the PyTorch module (for sanity checking)."""
    def gmap(x):
        x_left = jnp.concatenate([x[..., :, 1:2], x[..., :, :-1]], axis=-1)
        x_up = jnp.concatenate([x[..., 1:2, :], x[..., :-1, :]], axis=-2)
        gx = x - x_left
        gy = x - x_up
        return jnp.sqrt(gx * gx + gy * gy + eps)

    return jnp.mean(jnp.abs(gmap(inp) - gmap(tgt)))


if __name__ == "__main__":
    key = jax.random.PRNGKey(0)
    k1, k2 = jax.random.split(key)

    # Small shapes consistent with the module defaults (channels=3).
    N, C, H, W = 2, 3, 16, 128
    inp = jax.random.normal(k1, (N, C, H, W), dtype=jnp.float32)
    tgt = jax.random.normal(k2, (N, C, H, W), dtype=jnp.float32)
    ref = _reference(inp, tgt, eps=1e-6)

    # Single-tile path (tile height == H).
    loss = jax.block_until_ready(gradient_loss_2(inp, tgt, eps=1e-6))
    assert jnp.allclose(loss, ref, rtol=1e-5, atol=1e-5), (loss, ref)

    # Multi-tile path (exercises the halo carry across H-tiles).
    loss2 = jax.block_until_ready(gradient_loss_2(inp, tgt, eps=1e-6, tile_h=8))
    assert jnp.allclose(loss2, ref, rtol=1e-5, atol=1e-5), (loss2, ref)

    # Ragged last-tile path (H not a multiple of the tile height).
    H3 = 20
    inp3 = jax.random.normal(k1, (N, C, H3, W), dtype=jnp.float32)
    tgt3 = jax.random.normal(k2, (N, C, H3, W), dtype=jnp.float32)
    ref3 = _reference(inp3, tgt3, eps=1e-6)
    loss3 = jax.block_until_ready(gradient_loss_2(inp3, tgt3, eps=1e-6, tile_h=8))
    assert jnp.allclose(loss3, ref3, rtol=1e-5, atol=1e-5), (loss3, ref3)

    print("KERNEL_OK")
</pallas_src>

<mosaic_0001>
module attributes {stable_mosaic.version = 11 : i64} {
  func.func @_probe(%arg0: memref<8x128xf32, #tpu.memory_space<vmem>>, %arg1: memref<8x128xf32, #tpu.memory_space<vmem>>) attributes {dimension_semantics = [], scalar_prefetch = 0 : i64, scratch_operands = 0 : i64, tpu.core_type = #tpu.core_type<tc>} {
    %c0 = arith.constant 0 : index
    %c0_0 = arith.constant 0 : index
    %0 = vector.load %arg0[%c0, %c0_0] : memref<8x128xf32, #tpu.memory_space<vmem>>, vector<8x128xf32>
    %c1_i32 = arith.constant 1 : i32
    %1 = tpu.dynamic_rotate %0 by %c1_i32 dim 1 : vector<8x128xf32>, i32 -> vector<8x128xf32>
    %c1_i32_1 = arith.constant 1 : i32
    %2 = tpu.dynamic_rotate %1 by %c1_i32_1 dim 0 : vector<8x128xf32>, i32 -> vector<8x128xf32>
    %c0_2 = arith.constant 0 : index
    %c0_3 = arith.constant 0 : index
    %3 = vector.load %arg1[%c0_2, %c0_3] : memref<8x128xf32, #tpu.memory_space<vmem>>, vector<8x128xf32>
    tpu.vector_store %arg1[%c0_2, %c0_3], %2 {strides = array<i32>} : memref<8x128xf32, #tpu.memory_space<vmem>>, vector<8x128xf32>,
    return
  }
}

module attributes {stable_mosaic.version = 11 : i64} {
  func.func @_grad_loss_kernel(%arg0: i32, %arg1: i32, %arg2: memref<1x16x128xf32, #tpu.memory_space<vmem>>, %arg3: memref<1x16x128xf32, #tpu.memory_space<vmem>>, %arg4: memref<1x1x1xf32, #tpu.memory_space<vmem>>, %arg5: memref<16x128xf32, #tpu.memory_space<vmem>>, %arg6: memref<1x128xf32, #tpu.memory_space<vmem>>, %arg7: memref<1x128xf32, #tpu.memory_space<vmem>>) attributes {dimension_semantics = [#tpu.dimension_semantics<parallel>, #tpu.dimension_semantics<arbitrary>], iteration_bounds = array<i64: 6, 1>, scalar_prefetch = 0 : i64, scratch_operands = 3 : i64, tpu.core_type = #tpu.core_type<tc>, window_params = [{transform_indices = @transform_0, window_bounds = array<i64: 1, 16, 128>}, {transform_indices = @transform_1, window_bounds = array<i64: 1, 16, 128>}, {transform_indices = @transform_2, window_bounds = array<i64: 1, 1, 1>}]} {
    %c0_i32 = arith.constant 0 : i32
    %0 = arith.cmpi eq, %arg1, %c0_i32 : i32
    %1 = arith.extui %0 : i1 to i32
    %c0_i32_0 = arith.constant 0 : i32
    %2 = arith.cmpi ne, %1, %c0_i32_0 : i32
    scf.if %2 {
      %cst_23 = arith.constant 0.000000e+00 : f32
      %50 = vector.broadcast %cst_23 : f32 to vector<16x128xf32>
      %c0_24 = arith.constant 0 : index
      %c0_25 = arith.constant 0 : index
      %51 = vector.load %arg5[%c0_24, %c0_25] : memref<16x128xf32, #tpu.memory_space<vmem>>, vector<16x128xf32>
      tpu.vector_store %arg5[%c0_24, %c0_25], %50 {strides = array<i32>} : memref<16x128xf32, #tpu.memory_space<vmem>>, vector<16x128xf32>,
    } else {
    }
    %c0 = arith.constant 0 : index
    %c0_1 = arith.constant 0 : index
    %c0_2 = arith.constant 0 : index
    %3 = vector.load %arg2[%c0, %c0_1, %c0_2] : memref<1x16x128xf32, #tpu.memory_space<vmem>>, vector<1x16x128xf32>
    %4 = vector.shape_cast %3 : vector<1x16x128xf32> to vector<16x128xf32>
    %c0_3 = arith.constant 0 : index
    %c0_4 = arith.constant 0 : index
    %c0_5 = arith.constant 0 : index
    %5 = vector.load %arg3[%c0_3, %c0_4, %c0_5] : memref<1x16x128xf32, #tpu.memory_space<vmem>>, vector<1x16x128xf32>
    %6 = vector.shape_cast %5 : vector<1x16x128xf32> to vector<16x128xf32>
    %c0_i32_6 = arith.constant 0 : i32
    %7 = arith.cmpi eq, %arg1, %c0_i32_6 : i32
    %8 = arith.extui %7 : i1 to i32
    %c0_i32_7 = arith.constant 0 : i32
    %9 = arith.cmpi ne, %8, %c0_i32_7 : i32
    scf.if %9 {
      %50 = vector.extract_strided_slice %4 {offsets = [1, 0], sizes = [1, 128], strides = [1, 1]} : vector<16x128xf32> to vector<1x128xf32>
      %c0_23 = arith.constant 0 : index
      %c0_24 = arith.constant 0 : index
      %51 = vector.load %arg6[%c0_23, %c0_24] : memref<1x128xf32, #tpu.memory_space<vmem>>, vector<1x128xf32>
      tpu.vector_store %arg6[%c0_23, %c0_24], %50 {strides = array<i32>} : memref<1x128xf32, #tpu.memory_space<vmem>>, vector<1x128xf32>,
      %52 = vector.extract_strided_slice %6 {offsets = [1, 0], sizes = [1, 128], strides = [1, 1]} : vector<16x128xf32> to vector<1x128xf32>
      %c0_25 = arith.constant 0 : index
      %c0_26 = arith.constant 0 : index
      %53 = vector.load %arg7[%c0_25, %c0_26] : memref<1x128xf32, #tpu.memory_space<vmem>>, vector<1x128xf32>
      tpu.vector_store %arg7[%c0_25, %c0_26], %52 {strides = array<i32>} : memref<1x128xf32, #tpu.memory_space<vmem>>, vector<1x128xf32>,
    } else {
    }
    %c0_8 = arith.constant 0 : index
    %c0_9 = arith.constant 0 : index
    %10 = vector.load %arg6[%c0_8, %c0_9] : memref<1x128xf32, #tpu.memory_space<vmem>>, vector<1x128xf32>
    %11 = vector.extract_strided_slice %4 {offsets = [0, 1], sizes = [16, 1], strides = [1, 1]} : vector<16x128xf32> to vector<16x1xf32>
    %12 = vector.extract_strided_slice %4 {offsets = [0, 0], sizes = [16, 127], strides = [1, 1]} : vector<16x128xf32> to vector<16x127xf32>
    %13 = tpu.concatenate %11, %12 in 1 : vector<16x1xf32>, vector<16x127xf32> -> vector<16x128xf32>
    %14 = vector.extract_strided_slice %4 {offsets = [0, 0], sizes = [15, 128], strides = [1, 1]} : vector<16x128xf32> to vector<15x128xf32>
    %15 = tpu.concatenate %10, %14 in 0 : vector<1x128xf32>, vector<15x128xf32> -> vector<16x128xf32>
    %16 = arith.subf %4, %13 : vector<16x128xf32>
    %17 = arith.subf %4, %15 : vector<16x128xf32>
    %18 = arith.mulf %16, %16 : vector<16x128xf32>
    %19 = arith.mulf %17, %17 : vector<16x128xf32>
    %20 = arith.addf %18, %19 : vector<16x128xf32>
    %cst = arith.constant 9.99999997E-7 : f32
    %21 = vector.broadcast %cst : f32 to vector<16x128xf32>
    %22 = arith.addf %20, %21 : vector<16x128xf32>
    %23 = math.sqrt %22 : vector<16x128xf32>
    %c0_10 = arith.constant 0 : index
    %c0_11 = arith.constant 0 : index
    %24 = vector.load %arg7[%c0_10, %c0_11] : memref<1x128xf32, #tpu.memory_space<vmem>>, vector<1x128xf32>
    %25 = vector.extract_strided_slice %6 {offsets = [0, 1], sizes = [16, 1], strides = [1, 1]} : vector<16x128xf32> to vector<16x1xf32>
    %26 = vector.extract_strided_slice %6 {offsets = [0, 0], sizes = [16, 127], strides = [1, 1]} : vector<16x128xf32> to vector<16x127xf32>
    %27 = tpu.concatenate %25, %26 in 1 : vector<16x1xf32>, vector<16x127xf32> -> vector<16x128xf32>
    %28 = vector.extract_strided_slice %6 {offsets = [0, 0], sizes = [15, 128], strides = [1, 1]} : vector<16x128xf32> to vector<15x128xf32>
    %29 = tpu.concatenate %24, %28 in 0 : vector<1x128xf32>, vector<15x128xf32> -> vector<16x128xf32>
    %30 = arith.subf %6, %27 : vector<16x128xf32>
    %31 = arith.subf %6, %29 : vector<16x128xf32>
    %32 = arith.mulf %30, %30 : vector<16x128xf32>
    %33 = arith.mulf %31, %31 : vector<16x128xf32>
    %34 = arith.addf %32, %33 : vector<16x128xf32>
    %cst_12 = arith.constant 9.99999997E-7 : f32
    %35 = vector.broadcast %cst_12 : f32 to vector<16x128xf32>
    %36 = arith.addf %34, %35 : vector<16x128xf32>
    %37 = math.sqrt %36 : vector<16x128xf32>
    %38 = arith.subf %23, %37 : vector<16x128xf32>
    %39 = math.absf %38 : vector<16x128xf32>
    %c0_13 = arith.constant 0 : index
    %c0_14 = arith.constant 0 : index
    %40 = vector.load %arg5[%c0_13, %c0_14] : memref<16x128xf32, #tpu.memory_space<vmem>>, vector<16x128xf32>
    %41 = arith.addf %40, %39 : vector<16x128xf32>
    %c0_15 = arith.constant 0 : index
    %c0_16 = arith.constant 0 : index
    %42 = vector.load %arg5[%c0_15, %c0_16] : memref<16x128xf32, #tpu.memory_space<vmem>>, vector<16x128xf32>
    tpu.vector_store %arg5[%c0_15, %c0_16], %41 {strides = array<i32>} : memref<16x128xf32, #tpu.memory_space<vmem>>, vector<16x128xf32>,
    %43 = vector.extract_strided_slice %4 {offsets = [15, 0], sizes = [1, 128], strides = [1, 1]} : vector<16x128xf32> to vector<1x128xf32>
    %c0_17 = arith.constant 0 : index
    %c0_18 = arith.constant 0 : index
    %44 = vector.load %arg6[%c0_17, %c0_18] : memref<1x128xf32, #tpu.memory_space<vmem>>, vector<1x128xf32>
    tpu.vector_store %arg6[%c0_17, %c0_18], %43 {strides = array<i32>} : memref<1x128xf32, #tpu.memory_space<vmem>>, vector<1x128xf32>,
    %45 = vector.extract_strided_slice %6 {offsets = [15, 0], sizes = [1, 128], strides = [1, 1]} : vector<16x128xf32> to vector<1x128xf32>
    %c0_19 = arith.constant 0 : index
    %c0_20 = arith.constant 0 : index
    %46 = vector.load %arg7[%c0_19, %c0_20] : memref<1x128xf32, #tpu.memory_space<vmem>>, vector<1x128xf32>
    tpu.vector_store %arg7[%c0_19, %c0_20], %45 {strides = array<i32>} : memref<1x128xf32, #tpu.memory_space<vmem>>, vector<1x128xf32>,
    %c0_i32_21 = arith.constant 0 : i32
    %47 = arith.cmpi eq, %arg1, %c0_i32_21 : i32
    %48 = arith.extui %47 : i1 to i32
    %c0_i32_22 = arith.constant 0 : i32
    %49 = arith.cmpi ne, %48, %c0_i32_22 : i32
    scf.if %49 {
      %c0_23 = arith.constant 0 : index
      %c0_24 = arith.constant 0 : index
      %50 = vector.load %arg5[%c0_23, %c0_24] : memref<16x128xf32, #tpu.memory_space<vmem>>, vector<16x128xf32>
      %51 = vector.shape_cast %50 : vector<16x128xf32> to vector<1x16x128xf32>
      %cst_25 = arith.constant dense<0.000000e+00> : vector<1xf32>
      %52 = vector.multi_reduction <add>, %51, %cst_25 [1, 2] : vector<1x16x128xf32> to vector<1xf32>
      %53 = vector.shape_cast %52 : vector<1xf32> to vector<1x1x1xf32>
      %54 = vector.extract %53[0, 0, 0] : f32 from vector<1x1x1xf32>
      %55 = vector.broadcast %54 : f32 to vector<1x1xf32>
      %c0_26 = arith.constant 0 : index
      %c0_27 = arith.constant 0 : index
      %c0_28 = arith.constant 0 : index
      %56 = vector.load %arg4[%c0_26, %c0_27, %c0_28] : memref<1x1x1xf32, #tpu.memory_space<vmem>>, vector<1x1x1xf32>
      %57 = vector.shape_cast %56 : vector<1x1x1xf32> to vector<1x1xf32>
      %58 = vector.shape_cast %55 : vector<1x1xf32> to vector<1x1x1xf32>
      tpu.vector_store %arg4[%c0_26, %c0_27, %c0_28], %58 {strides = array<i32>} : memref<1x1x1xf32, #tpu.memory_space<vmem>>, vector<1x1x1xf32>,
    } else {
    }
    return
  }
  func.func @transform_0(%arg0: i32, %arg1: i32) -> (i32, i32, i32) {
    %c0_i32 = arith.constant 0 : i32
    %c0_i32_0 = arith.constant 0 : i32
    return %arg0, %arg1, %c0_i32 : i32, i32, i32
  }
  func.func @transform_1(%arg0: i32, %arg1: i32) -> (i32, i32, i32) {
    %c0_i32 = arith.constant 0 : i32
    %c0_i32_0 = arith.constant 0 : i32
    return %arg0, %arg1, %c0_i32 : i32, i32, i32
  }
  func.func @transform_2(%arg0: i32, %arg1: i32) -> (i32, i32, i32) {
    %c0_i32 = arith.constant 0 : i32
    %c0_i32_0 = arith.constant 0 : i32
    %c0_i32_1 = arith.constant 0 : i32
    return %arg0, %c0_i32, %c0_i32_0 : i32, i32, i32
  }
}

</mosaic_0001>

<llo_original>
// kernel: tpu_custom_call.1
$region0: #{tpu_custom_call.1}
  #allocation0 [shape = 'u32[]', space=smem, size = 0x4, offset = 0x4, fixed_abs, tag = 'smem constant byte address 0x4 - core index']
  #allocation1 [shape = 'u32[144,128]{1,0:T(1,128)}', space=vmem, size = 0x12000, scoped, tag = 'internal scratch']
  %s0 = inlined_call_operand.hbm [shape: f32[8,128], index: 0, kind: input, shape index: {}]
  %s1 = inlined_call_operand.hbm [shape: f32[8,128], index: 1, kind: output, shape index: {}]
  %s2 = sld [smem:[#allocation0]]
  $region18: #{tpu_custom_call.1} parent=0
    _
  %s4 = ssub.s32 1, %s2
  %s5 = scalar_select 0, %s4, %s2
  $region1: #{tpu_custom_call.1} parent=0
    #allocation2 [shape = 'u8[4096]{0}', space=vmem, size = 0x1000, scoped, tag = 'input window, operand 0, single buffered']
    #allocation3 [shape = 's32[1]{0}', space=sflag, size = 0x4, scoped, tag = 'scoped memory for tpu_custom_call.1']
    #allocation4 [shape = 's32[1]{0}', space=sflag, size = 0x4, scoped, tag = 'scoped memory for tpu_custom_call.1']
    #allocation5 [shape = 'u8[4096]{0}', space=vmem, size = 0x1000, scoped, tag = 'output window, operand 0, single buffered']
    %6 = vsyncpa [#allocation3], 0
    %7 = vsyncpa [#allocation4], 0
    // Predicated region
    $region2: #{tpu_custom_call.1} parent=1 // pred_check
      _
    $region3: #{tpu_custom_call.1} parent=1 // pred_check_branch
      %9 = sbr.rel (0) target = $region5
    $region4: #{tpu_custom_call.1} parent=1 // pred_region
      %s11 = ssub.s32 128, 128
      %12 = vsyncadd [#allocation3], %s11
      %s14 = sshll.u32 [#allocation2], 4
      %s15 = int_to_ptr.vmem [resolvable:$true] %s14
      %17 = dma.hbm_to_vmem [thread:$0]  %s0, 128, %s15, [#allocation3]
    $region5: #{tpu_custom_call.1} parent=1 // pred_fallthru
      _
    // Predicated region
    $region6: #{tpu_custom_call.1} parent=1 // pred_check
      _
    $region7: #{tpu_custom_call.1} parent=1 // pred_check_branch
      %19 = sbr.rel (0) target = $region9
    $region8: #{tpu_custom_call.1} parent=1 // pred_region
      %20 = dma.done [#allocation3], 128
    $region9: #{tpu_custom_call.1} parent=1 // pred_fallthru
      _
    %v21 = vld [vmem:[#allocation2] sm:$0xff]
    %22 = vrot.lane.b32.xlu0 %v21, 1
    %v23 = vpop.permute.xlu0 %22
    %v24 = vrot.slane %v23, 7
    %25 = vst [vmem:[#allocation5] sm:$0xff] %v24
    // Predicated region
    $region10: #{tpu_custom_call.1} parent=1 // pred_check
      _
    $region11: #{tpu_custom_call.1} parent=1 // pred_check_branch
      %27 = sbr.rel (0) target = $region13
    $region12: #{tpu_custom_call.1} parent=1 // pred_region
      %s29 = ssub.s32 128, 128
      %30 = vsyncadd [#allocation4], %s29
      %s32 = sshll.u32 [#allocation5], 4
      %s33 = int_to_ptr.vmem [resolvable:$true] %s32
      %35 = dma.vmem_to_hbm [thread:$0]  %s33, 128, %s1, [#allocation4]
    $region13: #{tpu_custom_call.1} parent=1 // pred_fallthru
      _
    // Predicated region
    $region14: #{tpu_custom_call.1} parent=1 // pred_check
      _
    $region15: #{tpu_custom_call.1} parent=1 // pred_check_branch
      %37 = sbr.rel (0) target = $region17
    $region16: #{tpu_custom_call.1} parent=1 // pred_region
      %38 = dma.done [#allocation4], 128
    $region17: #{tpu_custom_call.1} parent=1 // pred_fallthru
      _
    %39 = vsyncpa [#allocation3], 1
    %40 = vsyncpa [#allocation4], 1

// kernel: tpu_custom_call.1
$region0: #{tpu_custom_call.1}
  #allocation0 [shape = 'u32[]', space=smem, size = 0x4, offset = 0x4, fixed_abs, tag = 'smem constant byte address 0x4 - core index']
  #allocation1 [shape = 'u32[144,128]{1,0:T(1,128)}', space=vmem, size = 0x12000, scoped, tag = 'internal scratch']
  #allocation2 [shape = 'f32[16,128]{1,0:T(8,128)}', space=vmem, size = 0x2000, scoped, tag = 'scratch operand']
  #allocation3 [shape = 'f32[1,128]{1,0:T(1,128)}', space=vmem, size = 0x200, scoped, tag = 'scratch operand']
  #allocation4 [shape = 'f32[1,128]{1,0:T(1,128)}', space=vmem, size = 0x200, scoped, tag = 'scratch operand']
  %s0 = inlined_call_operand.hbm [shape: f32[6,16,128], index: 0, kind: input, shape index: {}]
  %s1 = inlined_call_operand.hbm [shape: f32[6,16,128], index: 1, kind: input, shape index: {}]
  %s2 = inlined_call_operand.vmem [shape: f32[6,1,1], index: 2, kind: output, shape index: {}]
  %s3 = sld [smem:[#allocation0]]
  $region61: #{tpu_custom_call.1} parent=0
    _
  %s5 = ssub.s32 1, %s3
  %s6 = scalar_select 0, %s5, %s3
  $region1: #{tpu_custom_call.1} parent=0
    #allocation5 [shape = 'u8[16384]{0}', space=vmem, size = 0x4000, scoped, tag = 'input window, operand 0']
    #allocation6 [shape = 's32[2]{0}', space=sflag, size = 0x8, scoped, tag = 'scoped memory for tpu_custom_call.1']
    #allocation7 [shape = 'u8[16384]{0}', space=vmem, size = 0x4000, scoped, tag = 'input window, operand 1']
    #allocation8 [shape = 's32[2]{0}', space=sflag, size = 0x8, scoped, tag = 'scoped memory for tpu_custom_call.1']
    %7 = vsyncpa [#allocation6], 0
    %s8 = scalar_lea.sflag [#allocation6], 1
    %9 = vsyncpa %s8, 0
    %10 = vsyncpa [#allocation8], 0
    %s11 = scalar_lea.sflag [#allocation8], 1
    %12 = vsyncpa %s11, 0
    loop: start=0, step=1, limit=8
    $region2: #{tpu_custom_call.1} parent=1 // loop_pre_header
      _
    $region3: #{tpu_custom_call.1} parent=1 // loop_header
      %s14 = sphi 0, %s18
      %p15 = scmp.ge.s32.totalorder %s14, 8
      %s21 = sphi 0, %s33
      %s22 = sphi 0, %s29
      %s23 = sphi 0, %s21
      %s24 = sphi 0, %s22
      %s25 = sphi 0, %s23
      %s26 = sphi 0, %s24
      %s38 = sphi 0, %s40
      %s41 = sphi 0, %s38
      %s42 = sphi 0, %s41
      %s58 = sphi 0, %s42
      %s66 = sphi 0, %s68
      %s69 = sphi 0, %s66
      %s70 = sphi 0, %s69
      %s86 = sphi 0, %s70
      %s92 = sphi 0, %s94
      %s95 = sphi 0, %s92
      %s96 = sphi 0, %s95
      %s112 = sphi 0, %s96
    $region4: #{tpu_custom_call.1} parent=1 // loop_header_branch
      %17 = sbr.rel (%p15) target = $region8
    $region5: #{tpu_custom_call.1} parent=1 // loop_body
      %s19 = ssub.s32 %s14, 1
      %s20 = ssub.s32 %s14, 2
      %s27 = sadd.s32 1, %s22
      %p28 = scmp.ge.s32.totalorder %s27, 1
      %s29 = scalar_select %p28, 0, %s27
      %s30 = sadd.s32 1, %s21
      %s31 = scalar_select %p28, %s30, %s21
      %p32 = scmp.ge.s32.totalorder %s31, 6
      %s33 = scalar_select %p32, 0, %s31
      %s34 = ssub.s32 %s21, %s33
      %s35 = ssub.s32 %s22, %s29
      %s36 = sor.u32 %s34, %s35
      %p37 = scmp.eq.s32.totalorder %s36, 0
      %s39 = sadd.s32 %s38, 1
      %s40 = scalar_select %p37, %s38, %s39
      %p43 = pneg %p37
      %p44 = scmp.eq.s32.totalorder %s14, 5
      %p45 = por %p43, %p44
      %p46 = scmp.ne.s32.totalorder %s38, %s41
      %p47 = scmp.eq.s32.totalorder %s14, 0
      %p48 = por %p46, %p47
      %p49 = scmp.ne.s32.totalorder %s38, %s41
      %p50 = scmp.eq.s32.totalorder %s19, 5
      %p51 = por %p49, %p50
      %p52 = scmp.ne.s32.totalorder %s41, %s42
      %p53 = scmp.eq.s32.totalorder %s19, 0
      %p54 = por %p52, %p53
      %p55 = scmp.ne.s32.totalorder %s41, %s42
      %p56 = scmp.eq.s32.totalorder %s20, 5
      %p57 = por %p55, %p56
      %p59 = scmp.ne.s32.totalorder %s42, %s58
      %p60 = scmp.eq.s32.totalorder %s20, 0
      %p61 = por %p59, %p60
      %s62 = ssub.s32 %s21, %s33
      %s63 = ssub.s32 %s22, %s29
      %s64 = sor.u32 %s62, %s63
      %p65 = scmp.eq.s32.totalorder %s64, 0
      %s67 = sadd.s32 %s66, 1
      %s68 = scalar_select %p65, %s66, %s67
      %p71 = pneg %p65
      %p72 = scmp.eq.s32.totalorder %s14, 5
      %p73 = por %p71, %p72
      %p74 = scmp.ne.s32.totalorder %s66, %s69
      %p75 = scmp.eq.s32.totalorder %s14, 0
      %p76 = por %p74, %p75
      %p77 = scmp.ne.s32.totalorder %s66, %s69
      %p78 = scmp.eq.s32.totalorder %s19, 5
      %p79 = por %p77, %p78
      %p80 = scmp.ne.s32.totalorder %s69, %s70
      %p81 = scmp.eq.s32.totalorder %s19, 0
      %p82 = por %p80, %p81
      %p83 = scmp.ne.s32.totalorder %s69, %s70
      %p84 = scmp.eq.s32.totalorder %s20, 5
      %p85 = por %p83, %p84
      %p87 = scmp.ne.s32.totalorder %s70, %s86
      %p88 = scmp.eq.s32.totalorder %s20, 0
      %p89 = por %p87, %p88
      %s90 = ssub.s32 %s21, %s33
      %p91 = scmp.eq.s32.totalorder %s90, 0
      %s93 = sadd.s32 %s92, 1
      %s94 = scalar_select %p91, %s92, %s93
      %p97 = pneg %p91
      %p98 = scmp.eq.s32.totalorder %s14, 5
      %p99 = por %p97, %p98
      %p100 = scmp.ne.s32.totalorder %s92, %s95
      %p101 = scmp.eq.s32.totalorder %s14, 0
      %p102 = por %p100, %p101
      %p103 = scmp.ne.s32.totalorder %s92, %s95
      %p104 = scmp.eq.s32.totalorder %s19, 5
      %p105 = por %p103, %p104
      %p106 = scmp.ne.s32.totalorder %s95, %s96
      %p107 = scmp.eq.s32.totalorder %s19, 0
      %p108 = por %p106, %p107
      %p109 = scmp.ne.s32.totalorder %s95, %s96
      %p110 = scmp.eq.s32.totalorder %s20, 5
      %p111 = por %p109, %p110
      %p113 = scmp.ne.s32.totalorder %s96, %s112
      %p114 = scmp.eq.s32.totalorder %s20, 0
      %p115 = por %p113, %p114
      %p116 = scmp.le.s32.totalorder 1, %s14
      %p117 = scmp.lt.s32.totalorder %s14, 7
      %p118 = pnand %p116, %p117
      %p119 = pneg %p118
      // Predicated region
      $region9: #{tpu_custom_call.1} parent=5 // pred_check
        _
      $region10: #{tpu_custom_call.1} parent=5 // pred_check_branch
        %121 = sbr.rel (%p118) target = $region12
      $region11: #{tpu_custom_call.1} parent=5 // pred_region
        %s122 = ssub.s32 %s14, 1
      $region12: #{tpu_custom_call.1} parent=5 // pred_fallthru
        _
      %p123 = scmp.lt.s32.totalorder %s14, 6
      // Predicated region
      $region13: #{tpu_custom_call.1} parent=5 // pred_check
        %p124 = pneg %p123
      $region14: #{tpu_custom_call.1} parent=5 // pred_check_branch
        %126 = sbr.rel (%p124) target = $region16
      $region15: #{tpu_custom_call.1} parent=5 // pred_region
        // Predicated region
        $region17: #{tpu_custom_call.1} parent=15 // pred_check
          %p127 = pneg %p48
        $region18: #{tpu_custom_call.1} parent=15 // pred_check_branch
          %129 = sbr.rel (%p127) target = $region20
        $region19: #{tpu_custom_call.1} parent=15 // pred_region
          %s130 = sand.u32 %s38, 1
          %s131 = scalar_lea.sflag [#allocation6], %s130
          %s132 = sand.u32 %s38, 1
          %s133 = smul.addr %s132, 16
          %s134 = scalar_lea.vmem [#allocation5], %s133
          %s135 = smul.u32 2, %s22
          %s137 = ssub.s32 256, 256
          %138 = vsyncadd %s131, %s137
          %s139 = smul.addr %s21, 2
          %s140 = sadd.s32 %s135, %s139
          %s141 = smul.addr %s140, 128
          %s142 = scalar_lea.hbm %s0, %s141
          %s143 = sshll.u32 %s134, 4
          %s144 = int_to_ptr.vmem [resolvable:$true] %s143
          %149 = dma.hbm_to_vmem [thread:$0]  %s142, 256, %s144, %s131, 128, 128, 8
        $region20: #{tpu_custom_call.1} parent=15 // pred_fallthru
          _
        // Predicated region
        $region21: #{tpu_custom_call.1} parent=15 // pred_check
          %p150 = pneg %p76
        $region22: #{tpu_custom_call.1} parent=15 // pred_check_branch
          %152 = sbr.rel (%p150) target = $region24
        $region23: #{tpu_custom_call.1} parent=15 // pred_region
          %s153 = sand.u32 %s66, 1
          %s154 = scalar_lea.sflag [#allocation8], %s153
          %s155 = sand.u32 %s66, 1
          %s156 = smul.addr %s155, 16
          %s157 = scalar_lea.vmem [#allocation7], %s156
          %s158 = smul.u32 2, %s22
          %s160 = ssub.s32 256, 256
          %161 = vsyncadd %s154, %s160
          %s162 = smul.addr %s21, 2
          %s163 = sadd.s32 %s158, %s162
          %s164 = smul.addr %s163, 128
          %s165 = scalar_lea.hbm %s1, %s164
          %s166 = sshll.u32 %s157, 4
          %s167 = int_to_ptr.vmem [resolvable:$true] %s166
          %172 = dma.hbm_to_vmem [thread:$0]  %s165, 256, %s167, %s154, 128, 128, 8
        $region24: #{tpu_custom_call.1} parent=15 // pred_fallthru
          _
      $region16: #{tpu_custom_call.1} parent=5 // pred_fallthru
        _
      %p173 = scmp.le.s32.totalorder 1, %s14
      %p174 = scmp.lt.s32.totalorder %s14, 7
      %p175 = pnand %p173, %p174
      %p176 = pneg %p175
      // Predicated region
      $region25: #{tpu_custom_call.1} parent=5 // pred_check
        _
      $region26: #{tpu_custom_call.1} parent=5 // pred_check_branch
        %178 = sbr.rel (%p175) target = $region28
      $region27: #{tpu_custom_call.1} parent=5 // pred_region
        %s179 = ssub.s32 %s14, 1
        %s180 = sand.u32 %s41, 1
        %s181 = scalar_lea.sflag [#allocation6], %s180
        %s182 = sand.u32 %s41, 1
        %s183 = smul.addr %s182, 16
        %s184 = scalar_lea.vmem [#allocation5], %s183
        // Predicated region
        $region29: #{tpu_custom_call.1} parent=27 // pred_check
          %p185 = pneg %p54
        $region30: #{tpu_custom_call.1} parent=27 // pred_check_branch
          %187 = sbr.rel (%p185) target = $region32
        $region31: #{tpu_custom_call.1} parent=27 // pred_region
          %188 = dma.done %s181, 256
        $region32: #{tpu_custom_call.1} parent=27 // pred_fallthru
          _
        %s189 = sand.u32 %s69, 1
        %s190 = scalar_lea.sflag [#allocation8], %s189
        %s191 = sand.u32 %s69, 1
        %s192 = smul.addr %s191, 16
        %s193 = scalar_lea.vmem [#allocation7], %s192
        // Predicated region
        $region33: #{tpu_custom_call.1} parent=27 // pred_check
          %p194 = pneg %p82
        $region34: #{tpu_custom_call.1} parent=27 // pred_check_branch
          %196 = sbr.rel (%p194) target = $region36
        $region35: #{tpu_custom_call.1} parent=27 // pred_region
          %197 = dma.done %s190, 256
        $region36: #{tpu_custom_call.1} parent=27 // pred_fallthru
          _
        %s198 = sand.u32 %s41, 1
        %s199 = scalar_lea.sflag [#allocation6], %s198
        %s200 = sand.u32 %s41, 1
        %s201 = smul.addr %s200, 16
        %s202 = scalar_lea.vmem [#allocation5], %s201
        %p203 = pneg %p54
        %p204 = pneg %p51
        %s205 = sand.u32 %s69, 1
        %s206 = scalar_lea.sflag [#allocation8], %s205
        %s207 = sand.u32 %s69, 1
        %s208 = smul.addr %s207, 16
        %s209 = scalar_lea.vmem [#allocation7], %s208
        %p210 = pneg %p82
        %p211 = pneg %p79
        %p212 = pneg %p108
        %p213 = pneg %p105
        %p214 = scmp.lt.s32.totalorder %s23, 5
        %s215 = scalar_select %p214, %s23, 5
        %s216 = scalar_lea.vmem %s2, %s215
        %s217 = smul.u32 2, %s24
        %s218 = smul.u32 2, %s24
        %p219 = scmp.lt.s32.totalorder %s23, 5
        %s220 = scalar_select %p219, %s23, 5
        %s221 = scalar_lea.vmem %s2, %s220
        %p222 = scmp.eq.s32.totalorder %s24, 0
        // Predicated region
        $region37: #{tpu_custom_call.1} parent=27 // pred_check
          %p223 = pneg %p222
        $region38: #{tpu_custom_call.1} parent=27 // pred_check_branch
          %225 = sbr.rel (%p223) target = $region40
        $region39: #{tpu_custom_call.1} parent=27 // pred_region
          %226 = vst [vmem:[#allocation2] sm:$0xff] 0.0
          %227 = vst [vmem:[#allocation2 + $0x8] sm:$0xff] 0.0
        $region40: #{tpu_custom_call.1} parent=27 // pred_fallthru
          _
        %v228 = vld [vmem:[%s184] sm:$0xff]
        %v229 = vld [vmem:[%s184 + $0x8] sm:$0xff]
        %v230 = vld [vmem:[%s193] sm:$0xff]
        %v231 = vld [vmem:[%s193 + $0x8] sm:$0xff]
        // Predicated region
        $region41: #{tpu_custom_call.1} parent=27 // pred_check
          %p232 = pneg %p222
        $region42: #{tpu_custom_call.1} parent=27 // pred_check_branch
          %234 = sbr.rel (%p232) target = $region44
        $region43: #{tpu_custom_call.1} parent=27 // pred_region
          %235 = vst [vmem:[#allocation3 - $0x1] sm:$0x2] %v228
          %236 = vst [vmem:[#allocation4 - $0x1] sm:$0x2] %v230
        $region44: #{tpu_custom_call.1} parent=27 // pred_fallthru
          _
        %v237 = vld [vmem:[#allocation3] sm:$0x1]
        %240 = vrot.lane.b32.xlu0 %v228, 127
        %v241 = vpop.permute.xlu0 %240
        %242 = vrot.lane.b32.xlu0 %v229, 127
        %v243 = vpop.permute.xlu0 %242
        %246 = vrot.lane.b32.xlu0 %v228, 1
        %v247 = vpop.permute.xlu0 %246
        %248 = vrot.lane.b32.xlu0 %v229, 1
        %v249 = vpop.permute.xlu0 %248
        %vm252 = vcmask 7168
        %v253 = vsel %vm252, %v241, %v247
        %v254 = vsel %vm252, %v243, %v249
        %vm255 = vcmask 1040384
        %v256 = vrot.slane %v228, 7
        %v257 = vrot.slane %v229, 7
        %v258 = vsel %vm255, %v256, %v257
        %v261 = vsel %vm255, %v237, %v256
        %v262 = vsub.f32 %v228, %v253
        %v263 = vsub.f32 %v229, %v254
        %v264 = vsub.f32 %v228, %v261
        %v265 = vsub.f32 %v229, %v258
        %v266 = vmul.f32 %v262, %v262
        %v267 = vmul.f32 %v263, %v263
        %v268 = vmul.f32 %v264, %v264
        %v269 = vmul.f32 %v265, %v265
        %v270 = vadd.f32 %v266, %v268
        %v271 = vadd.f32 %v267, %v269
        %v272 = vadd.f32 %v270, 1e-06
        %v273 = vadd.f32 %v271, 1e-06
        %v274 = vrsqrt.pop %v272
        %v275 = vmul.f32 %v272, %v274
        %vm276 = vcmp.eq.f32.partialorder %v272, inf
        %v277 = vsel %vm276, %v272, %v275
        %vm278 = vcmp.eq.f32.partialorder %v272, 0.0
        %v279 = vand.u32 %v272, 2147483648
        %v280 = vsel %vm278, %v279, %v277
        %v281 = vrsqrt.pop %v273
        %v282 = vmul.f32 %v273, %v281
        %vm283 = vcmp.eq.f32.partialorder %v273, inf
        %v284 = vsel %vm283, %v273, %v282
        %vm285 = vcmp.eq.f32.partialorder %v273, 0.0
        %v286 = vand.u32 %v273, 2147483648
        %v287 = vsel %vm285, %v286, %v284
        %v288 = vld [vmem:[#allocation4] sm:$0x1]
        %291 = vrot.lane.b32.xlu0 %v230, 127
        %v292 = vpop.permute.xlu0 %291
        %293 = vrot.lane.b32.xlu0 %v231, 127
        %v294 = vpop.permute.xlu0 %293
        %297 = vrot.lane.b32.xlu0 %v230, 1
        %v298 = vpop.permute.xlu0 %297
        %299 = vrot.lane.b32.xlu0 %v231, 1
        %v300 = vpop.permute.xlu0 %299
        %v303 = vsel %vm252, %v292, %v298
        %v304 = vsel %vm252, %v294, %v300
        %v305 = vrot.slane %v230, 7
        %v306 = vrot.slane %v231, 7
        %v307 = vsel %vm255, %v305, %v306
        %v310 = vsel %vm255, %v288, %v305
        %v311 = vsub.f32 %v230, %v303
        %v312 = vsub.f32 %v231, %v304
        %v313 = vsub.f32 %v230, %v310
        %v314 = vsub.f32 %v231, %v307
        %v315 = vmul.f32 %v311, %v311
        %v316 = vmul.f32 %v312, %v312
        %v317 = vmul.f32 %v313, %v313
        %v318 = vmul.f32 %v314, %v314
        %v319 = vadd.f32 %v315, %v317
        %v320 = vadd.f32 %v316, %v318
        %v321 = vadd.f32 %v319, 1e-06
        %v322 = vadd.f32 %v320, 1e-06
        %v323 = vrsqrt.pop %v321
        %v324 = vmul.f32 %v321, %v323
        %vm325 = vcmp.eq.f32.partialorder %v321, inf
        %v326 = vsel %vm325, %v321, %v324
        %vm327 = vcmp.eq.f32.partialorder %v321, 0.0
        %v328 = vand.u32 %v321, 2147483648
        %v329 = vsel %vm327, %v328, %v326
        %v330 = vrsqrt.pop %v322
        %v331 = vmul.f32 %v322, %v330
        %vm332 = vcmp.eq.f32.partialorder %v322, inf
        %v333 = vsel %vm332, %v322, %v331
        %vm334 = vcmp.eq.f32.partialorder %v322, 0.0
        %v335 = vand.u32 %v322, 2147483648
        %v336 = vsel %vm334, %v335, %v333
        %v337 = vsub.f32 %v280, %v329
        %v338 = vsub.f32 %v287, %v336
        %v339 = vand.u32 2147483647, %v337
        %v340 = vand.u32 2147483647, %v338
        %v341 = vld [vmem:[#allocation2] sm:$0xff]
        %v342 = vld [vmem:[#allocation2 + $0x8] sm:$0xff]
        %v343 = vadd.f32 %v341, %v339
        %v344 = vadd.f32 %v342, %v340
        %345 = vst [vmem:[#allocation2] sm:$0xff] %v343
        %346 = vst [vmem:[#allocation2 + $0x8] sm:$0xff] %v344
        %347 = vst [vmem:[#allocation3 - $0x7] sm:$0x80] %v229
        %348 = vst [vmem:[#allocation4 - $0x7] sm:$0x80] %v231
        // Predicated region
        $region45: #{tpu_custom_call.1} parent=27 // pred_check
          %p349 = pneg %p222
        $region46: #{tpu_custom_call.1} parent=27 // pred_check_branch
          %351 = sbr.rel (%p349) target = $region48
        $region47: #{tpu_custom_call.1} parent=27 // pred_region
          %v352 = vld [vmem:[#allocation2] sm:$0xff]
          %v353 = vld [vmem:[#allocation2 + $0x8] sm:$0xff]
          %v354 = vadd.f32 %v352, %v353
          %355 = vadd.xlane.f32.xlu0 %v354
          %v356 = vpop.xlane.xlu0 %355
          %v357 = vrot.slane %v356, 4
          %v358 = vadd.f32 %v356, %v357
          %v359 = vrot.slane %v358, 2
          %v360 = vadd.f32 %v358, %v359
          %v361 = vrot.slane %v360, 1
          %v362 = vadd.f32 %v360, %v361
          %s363 = vtos %v362
          %v364 = vstv %s363
          %vm365 = vcmask 0
          %366 = vst.msk [vmem:[%s221] sm:$0x1] %vm365, %v364
        $region48: #{tpu_custom_call.1} parent=27 // pred_fallthru
          _
        %p367 = scmp.lt.s32.totalorder %s23, 5
        %s368 = scalar_select %p367, %s23, 5
        %s369 = scalar_lea.vmem %s2, %s368
        // Predicated region
        $region49: #{tpu_custom_call.1} parent=27 // pred_check
          %p370 = pneg %p105
        $region50: #{tpu_custom_call.1} parent=27 // pred_check_branch
          %372 = sbr.rel (%p370) target = $region52
        $region51: #{tpu_custom_call.1} parent=27 // pred_region
          _
        $region52: #{tpu_custom_call.1} parent=27 // pred_fallthru
          _
      $region28: #{tpu_custom_call.1} parent=5 // pred_fallthru
        _
      %p373 = scmp.le.s32.totalorder 2, %s14
      // Predicated region
      $region53: #{tpu_custom_call.1} parent=5 // pred_check
        %p374 = pneg %p373
      $region54: #{tpu_custom_call.1} parent=5 // pred_check_branch
        %376 = sbr.rel (%p374) target = $region56
      $region55: #{tpu_custom_call.1} parent=5 // pred_region
        %s377 = ssub.s32 %s14, 2
        // Predicated region
        $region57: #{tpu_custom_call.1} parent=55 // pred_check
          %p378 = pneg %p111
        $region58: #{tpu_custom_call.1} parent=55 // pred_check_branch
          %380 = sbr.rel (%p378) target = $region60
        $region59: #{tpu_custom_call.1} parent=55 // pred_region
          %p381 = scmp.lt.s32.totalorder %s25, 5
          %s382 = scalar_select %p381, %s25, 5
          %s383 = scalar_lea.vmem %s2, %s382
        $region60: #{tpu_custom_call.1} parent=55 // pred_fallthru
          _
      $region56: #{tpu_custom_call.1} parent=5 // pred_fallthru
        _
    $region6: #{tpu_custom_call.1} parent=1 // loop_footer
      %s18 = sadd.s32 1, %s14
    $region7: #{tpu_custom_call.1} parent=1 // loop_footer_branch
      %13 = sbr.rel target = $region3
    $region8: #{tpu_custom_call.1} parent=1 // loop_exit
      _
    %384 = vsyncpa [#allocation6], 1
    %s385 = scalar_lea.sflag [#allocation6], 1
    %386 = vsyncpa %s385, 1
    %387 = vsyncpa [#allocation8], 1
    %s388 = scalar_lea.sflag [#allocation8], 1
    %389 = vsyncpa %s388, 1

</llo_original>
